<compile_context>
chip_gen: v5e
topology: v5e:2x2
jax: 0.10.0
libtpu: 0.0.40
codegen_flags: <defaults>
</compile_context>

<pallas_src>
import jax
import jax.numpy as jnp
from jax import lax
from jax.experimental import pallas as pl
from jax.experimental.pallas import tpu as pltpu

EPS = 1e-8  # torch F.cosine_similarity default eps


def _round_up(x, m):
    return ((x + m - 1) // m) * m


def _cosine_score_kernel(reps_ref, cent_ref, out_ref):
    # reps_ref: [TB, D]   cent_ref: [TCK, D]   out_ref: [TB, TCK]
    r = reps_ref[...].astype(jnp.float32)
    c = cent_ref[...].astype(jnp.float32)

    # Inverse norms (VPU reduction + EUP rsqrt).  Clamp squared norms at
    # EPS^2 so zero-padded rows are safe.
    c_sq = jnp.sum(c * c, axis=-1, keepdims=True)                 # [TCK, 1]
    c_inv = lax.rsqrt(jnp.maximum(c_sq, EPS * EPS))               # [TCK, 1]
    c_n = c * c_inv                                               # lane bcast

    r_sq = jnp.sum(r * r, axis=-1, keepdims=True)                 # [TB, 1]
    r_inv = lax.rsqrt(jnp.maximum(r_sq, EPS * EPS))               # [TB, 1]

    # Transposed-RHS matmul on the MXU: contract the last dim of both
    # operands, no materialized c.T.
    dots = lax.dot_general(
        r, c_n,
        dimension_numbers=(((1,), (1,)), ((), ())),
        preferred_element_type=jnp.float32)                       # [TB, TCK]

    out_ref[...] = (dots * r_inv).astype(out_ref.dtype)


def cl_model_forward(reps, centers):
    """Pallas equivalent of CLModel.forward(reps, centers, cosine_similarity)."""
    B, D = reps.shape
    C, K, Dc = centers.shape
    assert D == Dc, "feature dims must match"
    CK = C * K
    centers_flat = centers.reshape(CK, D)

    # Tile sizes: sublane-aligned B tile, lane-dense (multiple of 128) CK
    # tile.  TILE_CK=1024 rows of D=768 f32 is ~3 MiB per buffer, safely
    # inside scoped VMEM on v5e/v6e/v7x with double-buffering.
    TILE_B = min(_round_up(B, 8), 256)
    TILE_CK = min(_round_up(CK, 128), 1024)

    B_pad = _round_up(B, TILE_B)
    CK_pad = _round_up(CK, TILE_CK)

    if B_pad != B:
        reps = jnp.pad(reps, ((0, B_pad - B), (0, 0)))
    if CK_pad != CK:
        centers_flat = jnp.pad(centers_flat, ((0, CK_pad - CK), (0, 0)))

    grid = (B_pad // TILE_B, CK_pad // TILE_CK)

    # TODO(synk): if D ever grows beyond a few thousand, add a trailing
    # "arbitrary" D-reduction grid axis with f32 accumulator scratch; at
    # D=768 a full-D row fits comfortably in one block.
    out = pl.pallas_call(
        _cosine_score_kernel,
        out_shape=jax.ShapeDtypeStruct((B_pad, CK_pad), jnp.float32),
        grid=grid,
        in_specs=[
            pl.BlockSpec((TILE_B, D), lambda i, j: (i, 0)),
            pl.BlockSpec((TILE_CK, D), lambda i, j: (j, 0)),
        ],
        out_specs=pl.BlockSpec((TILE_B, TILE_CK), lambda i, j: (i, j)),
        compiler_params=pltpu.CompilerParams(
            dimension_semantics=("parallel", "parallel")),
    )(reps, centers_flat)

    return out[:B, :CK].reshape(B, C, K)


def cl_model_forward_ref(reps, centers):
    """Pure-JAX reference mirroring the PyTorch broadcast + cosine sim."""
    B, D = reps.shape
    C, K, _ = centers.shape
    r = jnp.broadcast_to(reps[:, None, None, :], (B, C, K, D))
    c = jnp.broadcast_to(centers[None, :, :, :], (B, C, K, D))
    dots = jnp.sum(r * c, axis=-1)
    denom = jnp.maximum(
        jnp.linalg.norm(r, axis=-1) * jnp.linalg.norm(c, axis=-1), EPS)
    return dots / denom


if __name__ == "__main__":
    # TODO(synk): the HF BERT encoders, GRU and MLP heads from __init__ are
    # only used in gen_f_reps / gen_f_reps_ours (never in forward); they are
    # not reproduced here.
    key = jax.random.PRNGKey(0)
    k_reps, k_cent = jax.random.split(key)

    B = 8            # batch of utterance representations
    D = 768          # self.dim in the module
    C = 4            # num_classes
    K = 8            # num_centers per class

    reps = jax.random.normal(k_reps, (B, D), dtype=jnp.float32)
    centers = jax.random.normal(k_cent, (C, K, D), dtype=jnp.float32)

    scores = cl_model_forward(reps, centers)
    scores = jax.block_until_ready(scores)

    ref = cl_model_forward_ref(reps, centers)
    assert scores.shape == (B, C, K)
    assert jnp.allclose(scores, ref, atol=1e-5, rtol=1e-5)

    print("KERNEL_OK")
</pallas_src>

<mosaic_0001>
module attributes {stable_mosaic.version = 11 : i64} {
  func.func @_cosine_score_kernel(%arg0: i32, %arg1: i32, %arg2: memref<8x768xf32, #tpu.memory_space<vmem>>, %arg3: memref<128x768xf32, #tpu.memory_space<vmem>>, %arg4: memref<8x128xf32, #tpu.memory_space<vmem>>) attributes {dimension_semantics = [#tpu.dimension_semantics<parallel>, #tpu.dimension_semantics<parallel>], iteration_bounds = array<i64: 1, 1>, scalar_prefetch = 0 : i64, scratch_operands = 0 : i64, tpu.core_type = #tpu.core_type<tc>, window_params = [{transform_indices = @transform_0, window_bounds = array<i64: 8, 768>}, {transform_indices = @transform_1, window_bounds = array<i64: 128, 768>}, {transform_indices = @transform_2, window_bounds = array<i64: 8, 128>}]} {
    %c0 = arith.constant 0 : index
    %c0_0 = arith.constant 0 : index
    %0 = vector.load %arg2[%c0, %c0_0] : memref<8x768xf32, #tpu.memory_space<vmem>>, vector<8x768xf32>
    %c0_1 = arith.constant 0 : index
    %c0_2 = arith.constant 0 : index
    %1 = vector.load %arg3[%c0_1, %c0_2] : memref<128x768xf32, #tpu.memory_space<vmem>>, vector<128x768xf32>
    %2 = arith.mulf %1, %1 : vector<128x768xf32>
    %cst = arith.constant dense<0.000000e+00> : vector<128xf32>
    %3 = vector.multi_reduction <add>, %2, %cst [1] : vector<128x768xf32> to vector<128xf32>
    %4 = vector.shape_cast %3 : vector<128xf32> to vector<128x1xf32>
    %cst_3 = arith.constant 1.000000e-16 : f32
    %5 = vector.broadcast %cst_3 : f32 to vector<128x1xf32>
    %6 = arith.maximumf %4, %5 : vector<128x1xf32>
    %7 = math.rsqrt %6 : vector<128x1xf32>
    %8 = vector.broadcast %7 : vector<128x1xf32> to vector<128x768xf32>
    %9 = arith.mulf %1, %8 : vector<128x768xf32>
    %10 = arith.mulf %0, %0 : vector<8x768xf32>
    %cst_4 = arith.constant dense<0.000000e+00> : vector<8xf32>
    %11 = vector.multi_reduction <add>, %10, %cst_4 [1] : vector<8x768xf32> to vector<8xf32>
    %12 = vector.shape_cast %11 : vector<8xf32> to vector<8x1xf32>
    %cst_5 = arith.constant 1.000000e-16 : f32
    %13 = vector.broadcast %cst_5 : f32 to vector<8x1xf32>
    %14 = arith.maximumf %12, %13 : vector<8x1xf32>
    %15 = math.rsqrt %14 : vector<8x1xf32>
    %cst_6 = arith.constant dense<0.000000e+00> : vector<8x128xf32>
    %16 = tpu.matmul %0, %9, %cst_6 {dimension_numbers = #tpu.dot_dimension_numbers<[1], [1], [0], [0], [0, 0, 1, 0], [], []>} : vector<8x768xf32>, vector<128x768xf32>, vector<8x128xf32> -> vector<8x128xf32>
    %17 = vector.broadcast %15 : vector<8x1xf32> to vector<8x128xf32>
    %18 = arith.mulf %16, %17 : vector<8x128xf32>
    %c0_7 = arith.constant 0 : index
    %c0_8 = arith.constant 0 : index
    %19 = vector.load %arg4[%c0_7, %c0_8] : memref<8x128xf32, #tpu.memory_space<vmem>>, vector<8x128xf32>
    tpu.vector_store %arg4[%c0_7, %c0_8], %18 {strides = array<i32>} : memref<8x128xf32, #tpu.memory_space<vmem>>, vector<8x128xf32>,
    return
  }
  func.func @transform_0(%arg0: i32, %arg1: i32) -> (i32, i32) {
    %c0_i32 = arith.constant 0 : i32
    %c0_i32_0 = arith.constant 0 : i32
    return %arg0, %c0_i32 : i32, i32
  }
  func.func @transform_1(%arg0: i32, %arg1: i32) -> (i32, i32) {
    %c0_i32 = arith.constant 0 : i32
    %c0_i32_0 = arith.constant 0 : i32
    return %arg1, %c0_i32 : i32, i32
  }
  func.func @transform_2(%arg0: i32, %arg1: i32) -> (i32, i32) {
    %c0_i32 = arith.constant 0 : i32
    return %arg0, %arg1 : i32, i32
  }
}

</mosaic_0001>

<llo_original>
// kernel: tpu_custom_call.1
$region0: #{tpu_custom_call.1}
  #allocation0 [shape = 'u32[]', space=smem, size = 0x4, offset = 0x4, fixed_abs, tag = 'smem constant byte address 0x4 - core index']
  #allocation1 [shape = 'u32[72,128]{1,0:T(1,128)}', space=vmem, size = 0x9000, scoped, tag = 'internal scratch']
  %s0 = inlined_call_operand.hbm [shape: f32[8,768], index: 0, kind: input, shape index: {}]
  %s1 = inlined_call_operand.hbm [shape: f32[128,768], index: 1, kind: input, shape index: {}]
  %s2 = inlined_call_operand.hbm [shape: f32[8,128], index: 2, kind: output, shape index: {}]
  %s3 = sld [smem:[#allocation0]]
  $region26: #{tpu_custom_call.1} parent=0
    _
  %s5 = ssub.s32 1, %s3
  %s6 = scalar_select 0, %s5, %s3
  $region1: #{tpu_custom_call.1} parent=0
    #allocation2 [shape = 'u8[24576]{0}', space=vmem, size = 0x6000, scoped, tag = 'input window, operand 0, single buffered']
    #allocation3 [shape = 's32[1]{0}', space=sflag, size = 0x4, scoped, tag = 'scoped memory for tpu_custom_call.1']
    #allocation4 [shape = 's32[1]{0}', space=sflag, size = 0x4, scoped, tag = 'scoped memory for tpu_custom_call.1']
    #allocation5 [shape = 'u8[393216]{0}', space=vmem, size = 0x60000, scoped, tag = 'input window, operand 1, single buffered']
    #allocation6 [shape = 's32[1]{0}', space=sflag, size = 0x4, scoped, tag = 'scoped memory for tpu_custom_call.1']
    #allocation7 [shape = 'u8[4096]{0}', space=vmem, size = 0x1000, scoped, tag = 'output window, operand 0, single buffered']
    %7 = vsyncpa [#allocation3], 0
    %8 = vsyncpa [#allocation6], 0
    %9 = vsyncpa [#allocation4], 0
    // Predicated region
    $region2: #{tpu_custom_call.1} parent=1 // pred_check
      _
    $region3: #{tpu_custom_call.1} parent=1 // pred_check_branch
      %11 = sbr.rel (0) target = $region5
    $region4: #{tpu_custom_call.1} parent=1 // pred_region
      %13 = vsyncadd [#allocation3], 0
      %s15 = sshll.u32 %s0, 4
      %s16 = int_to_ptr.hbm [resolvable:$true] %s15
      %s17 = sshll.u32 [#allocation2], 4
      %s18 = int_to_ptr.vmem [resolvable:$true] %s17
      %20 = dma.hbm_to_vmem [thread:$0]  %s16, 768, %s18, [#allocation3]
    $region5: #{tpu_custom_call.1} parent=1 // pred_fallthru
      _
    // Predicated region
    $region6: #{tpu_custom_call.1} parent=1 // pred_check
      _
    $region7: #{tpu_custom_call.1} parent=1 // pred_check_branch
      %22 = sbr.rel (0) target = $region9
    $region8: #{tpu_custom_call.1} parent=1 // pred_region
      %24 = vsyncadd [#allocation6], 0
      %s25 = sshll.u32 %s1, 4
      %s26 = int_to_ptr.hbm [resolvable:$true] %s25
      %s27 = sshll.u32 [#allocation5], 4
      %s28 = int_to_ptr.vmem [resolvable:$true] %s27
      %33 = dma.hbm_to_vmem [thread:$0]  %s26, 12288, %s28, [#allocation6], 768, 768, 48
    $region9: #{tpu_custom_call.1} parent=1 // pred_fallthru
      _
    // Predicated region
    $region10: #{tpu_custom_call.1} parent=1 // pred_check
      _
    $region11: #{tpu_custom_call.1} parent=1 // pred_check_branch
      %35 = sbr.rel (0) target = $region13
    $region12: #{tpu_custom_call.1} parent=1 // pred_region
      %37 = dma.done [#allocation3], 768
    $region13: #{tpu_custom_call.1} parent=1 // pred_fallthru
      _
    // Predicated region
    $region14: #{tpu_custom_call.1} parent=1 // pred_check
      _
    $region15: #{tpu_custom_call.1} parent=1 // pred_check_branch
      %39 = sbr.rel (0) target = $region17
    $region16: #{tpu_custom_call.1} parent=1 // pred_region
      %41 = dma.done [#allocation6], 12288
    $region17: #{tpu_custom_call.1} parent=1 // pred_fallthru
      _
    %v42 = vld [vmem:[#allocation2] sm:$0xff]
    %v43 = vld [vmem:[#allocation2 + $0x8] sm:$0xff]
    %v44 = vld [vmem:[#allocation2 + $0x10] sm:$0xff]
    %v45 = vld [vmem:[#allocation2 + $0x18] sm:$0xff]
    %v46 = vld [vmem:[#allocation2 + $0x20] sm:$0xff]
    %v47 = vld [vmem:[#allocation2 + $0x28] sm:$0xff]
    %v48 = vld [vmem:[#allocation5] sm:$0xff]
    %v49 = vld [vmem:[#allocation5 + $0x8] sm:$0xff]
    %v50 = vld [vmem:[#allocation5 + $0x10] sm:$0xff]
    %v51 = vld [vmem:[#allocation5 + $0x18] sm:$0xff]
    %v52 = vld [vmem:[#allocation5 + $0x20] sm:$0xff]
    %v53 = vld [vmem:[#allocation5 + $0x28] sm:$0xff]
    %v54 = vld [vmem:[#allocation5 + $0x30] sm:$0xff]
    %v55 = vld [vmem:[#allocation5 + $0x38] sm:$0xff]
    %v56 = vld [vmem:[#allocation5 + $0x40] sm:$0xff]
    %v57 = vld [vmem:[#allocation5 + $0x48] sm:$0xff]
    %v58 = vld [vmem:[#allocation5 + $0x50] sm:$0xff]
    %v59 = vld [vmem:[#allocation5 + $0x58] sm:$0xff]
    %v60 = vld [vmem:[#allocation5 + $0x60] sm:$0xff]
    %v61 = vld [vmem:[#allocation5 + $0x68] sm:$0xff]
    %v62 = vld [vmem:[#allocation5 + $0x70] sm:$0xff]
    %v63 = vld [vmem:[#allocation5 + $0x78] sm:$0xff]
    %v64 = vld [vmem:[#allocation5 + $0x80] sm:$0xff]
    %v65 = vld [vmem:[#allocation5 + $0x88] sm:$0xff]
    %v66 = vld [vmem:[#allocation5 + $0x90] sm:$0xff]
    %v67 = vld [vmem:[#allocation5 + $0x98] sm:$0xff]
    %v68 = vld [vmem:[#allocation5 + $0xa0] sm:$0xff]
    %v69 = vld [vmem:[#allocation5 + $0xa8] sm:$0xff]
    %v70 = vld [vmem:[#allocation5 + $0xb0] sm:$0xff]
    %v71 = vld [vmem:[#allocation5 + $0xb8] sm:$0xff]
    %v72 = vld [vmem:[#allocation5 + $0xc0] sm:$0xff]
    %v73 = vld [vmem:[#allocation5 + $0xc8] sm:$0xff]
    %v74 = vld [vmem:[#allocation5 + $0xd0] sm:$0xff]
    %v75 = vld [vmem:[#allocation5 + $0xd8] sm:$0xff]
    %v76 = vld [vmem:[#allocation5 + $0xe0] sm:$0xff]
    %v77 = vld [vmem:[#allocation5 + $0xe8] sm:$0xff]
    %v78 = vld [vmem:[#allocation5 + $0xf0] sm:$0xff]
    %v79 = vld [vmem:[#allocation5 + $0xf8] sm:$0xff]
    %v80 = vld [vmem:[#allocation5 + $0x100] sm:$0xff]
    %v81 = vld [vmem:[#allocation5 + $0x108] sm:$0xff]
    %v82 = vld [vmem:[#allocation5 + $0x110] sm:$0xff]
    %v83 = vld [vmem:[#allocation5 + $0x118] sm:$0xff]
    %v84 = vld [vmem:[#allocation5 + $0x120] sm:$0xff]
    %v85 = vld [vmem:[#allocation5 + $0x128] sm:$0xff]
    %v86 = vld [vmem:[#allocation5 + $0x130] sm:$0xff]
    %v87 = vld [vmem:[#allocation5 + $0x138] sm:$0xff]
    %v88 = vld [vmem:[#allocation5 + $0x140] sm:$0xff]
    %v89 = vld [vmem:[#allocation5 + $0x148] sm:$0xff]
    %v90 = vld [vmem:[#allocation5 + $0x150] sm:$0xff]
    %v91 = vld [vmem:[#allocation5 + $0x158] sm:$0xff]
    %v92 = vld [vmem:[#allocation5 + $0x160] sm:$0xff]
    %v93 = vld [vmem:[#allocation5 + $0x168] sm:$0xff]
    %v94 = vld [vmem:[#allocation5 + $0x170] sm:$0xff]
    %v95 = vld [vmem:[#allocation5 + $0x178] sm:$0xff]
    %v96 = vld [vmem:[#allocation5 + $0x180] sm:$0xff]
    %v97 = vld [vmem:[#allocation5 + $0x188] sm:$0xff]
    %v98 = vld [vmem:[#allocation5 + $0x190] sm:$0xff]
    %v99 = vld [vmem:[#allocation5 + $0x198] sm:$0xff]
    %v100 = vld [vmem:[#allocation5 + $0x1a0] sm:$0xff]
    %v101 = vld [vmem:[#allocation5 + $0x1a8] sm:$0xff]
    %v102 = vld [vmem:[#allocation5 + $0x1b0] sm:$0xff]
    %v103 = vld [vmem:[#allocation5 + $0x1b8] sm:$0xff]
    %v104 = vld [vmem:[#allocation5 + $0x1c0] sm:$0xff]
    %v105 = vld [vmem:[#allocation5 + $0x1c8] sm:$0xff]
    %v106 = vld [vmem:[#allocation5 + $0x1d0] sm:$0xff]
    %v107 = vld [vmem:[#allocation5 + $0x1d8] sm:$0xff]
    %v108 = vld [vmem:[#allocation5 + $0x1e0] sm:$0xff]
    %v109 = vld [vmem:[#allocation5 + $0x1e8] sm:$0xff]
    %v110 = vld [vmem:[#allocation5 + $0x1f0] sm:$0xff]
    %v111 = vld [vmem:[#allocation5 + $0x1f8] sm:$0xff]
    %v112 = vld [vmem:[#allocation5 + $0x200] sm:$0xff]
    %v113 = vld [vmem:[#allocation5 + $0x208] sm:$0xff]
    %v114 = vld [vmem:[#allocation5 + $0x210] sm:$0xff]
    %v115 = vld [vmem:[#allocation5 + $0x218] sm:$0xff]
    %v116 = vld [vmem:[#allocation5 + $0x220] sm:$0xff]
    %v117 = vld [vmem:[#allocation5 + $0x228] sm:$0xff]
    %v118 = vld [vmem:[#allocation5 + $0x230] sm:$0xff]
    %v119 = vld [vmem:[#allocation5 + $0x238] sm:$0xff]
    %v120 = vld [vmem:[#allocation5 + $0x240] sm:$0xff]
    %v121 = vld [vmem:[#allocation5 + $0x248] sm:$0xff]
    %v122 = vld [vmem:[#allocation5 + $0x250] sm:$0xff]
    %v123 = vld [vmem:[#allocation5 + $0x258] sm:$0xff]
    %v124 = vld [vmem:[#allocation5 + $0x260] sm:$0xff]
    %v125 = vld [vmem:[#allocation5 + $0x268] sm:$0xff]
    %v126 = vld [vmem:[#allocation5 + $0x270] sm:$0xff]
    %v127 = vld [vmem:[#allocation5 + $0x278] sm:$0xff]
    %v128 = vld [vmem:[#allocation5 + $0x280] sm:$0xff]
    %v129 = vld [vmem:[#allocation5 + $0x288] sm:$0xff]
    %v130 = vld [vmem:[#allocation5 + $0x290] sm:$0xff]
    %v131 = vld [vmem:[#allocation5 + $0x298] sm:$0xff]
    %v132 = vld [vmem:[#allocation5 + $0x2a0] sm:$0xff]
    %v133 = vld [vmem:[#allocation5 + $0x2a8] sm:$0xff]
    %v134 = vld [vmem:[#allocation5 + $0x2b0] sm:$0xff]
    %v135 = vld [vmem:[#allocation5 + $0x2b8] sm:$0xff]
    %v136 = vld [vmem:[#allocation5 + $0x2c0] sm:$0xff]
    %v137 = vld [vmem:[#allocation5 + $0x2c8] sm:$0xff]
    %v138 = vld [vmem:[#allocation5 + $0x2d0] sm:$0xff]
    %v139 = vld [vmem:[#allocation5 + $0x2d8] sm:$0xff]
    %v140 = vld [vmem:[#allocation5 + $0x2e0] sm:$0xff]
    %v141 = vld [vmem:[#allocation5 + $0x2e8] sm:$0xff]
    %v142 = vld [vmem:[#allocation5 + $0x2f0] sm:$0xff]
    %v143 = vld [vmem:[#allocation5 + $0x2f8] sm:$0xff]
    %v144 = vmul.f32 %v48, %v48
    %v145 = vmul.f32 %v49, %v49
    %v146 = vmul.f32 %v50, %v50
    %v147 = vmul.f32 %v51, %v51
    %v148 = vmul.f32 %v52, %v52
    %v149 = vmul.f32 %v53, %v53
    %v150 = vmul.f32 %v54, %v54
    %v151 = vmul.f32 %v55, %v55
    %v152 = vmul.f32 %v56, %v56
    %v153 = vmul.f32 %v57, %v57
    %v154 = vmul.f32 %v58, %v58
    %v155 = vmul.f32 %v59, %v59
    %v156 = vmul.f32 %v60, %v60
    %v157 = vmul.f32 %v61, %v61
    %v158 = vmul.f32 %v62, %v62
    %v159 = vmul.f32 %v63, %v63
    %v160 = vmul.f32 %v64, %v64
    %v161 = vmul.f32 %v65, %v65
    %v162 = vmul.f32 %v66, %v66
    %v163 = vmul.f32 %v67, %v67
    %v164 = vmul.f32 %v68, %v68
    %v165 = vmul.f32 %v69, %v69
    %v166 = vmul.f32 %v70, %v70
    %v167 = vmul.f32 %v71, %v71
    %v168 = vmul.f32 %v72, %v72
    %v169 = vmul.f32 %v73, %v73
    %v170 = vmul.f32 %v74, %v74
    %v171 = vmul.f32 %v75, %v75
    %v172 = vmul.f32 %v76, %v76
    %v173 = vmul.f32 %v77, %v77
    %v174 = vmul.f32 %v78, %v78
    %v175 = vmul.f32 %v79, %v79
    %v176 = vmul.f32 %v80, %v80
    %v177 = vmul.f32 %v81, %v81
    %v178 = vmul.f32 %v82, %v82
    %v179 = vmul.f32 %v83, %v83
    %v180 = vmul.f32 %v84, %v84
    %v181 = vmul.f32 %v85, %v85
    %v182 = vmul.f32 %v86, %v86
    %v183 = vmul.f32 %v87, %v87
    %v184 = vmul.f32 %v88, %v88
    %v185 = vmul.f32 %v89, %v89
    %v186 = vmul.f32 %v90, %v90
    %v187 = vmul.f32 %v91, %v91
    %v188 = vmul.f32 %v92, %v92
    %v189 = vmul.f32 %v93, %v93
    %v190 = vmul.f32 %v94, %v94
    %v191 = vmul.f32 %v95, %v95
    %v192 = vmul.f32 %v96, %v96
    %v193 = vmul.f32 %v97, %v97
    %v194 = vmul.f32 %v98, %v98
    %v195 = vmul.f32 %v99, %v99
    %v196 = vmul.f32 %v100, %v100
    %v197 = vmul.f32 %v101, %v101
    %v198 = vmul.f32 %v102, %v102
    %v199 = vmul.f32 %v103, %v103
    %v200 = vmul.f32 %v104, %v104
    %v201 = vmul.f32 %v105, %v105
    %v202 = vmul.f32 %v106, %v106
    %v203 = vmul.f32 %v107, %v107
    %v204 = vmul.f32 %v108, %v108
    %v205 = vmul.f32 %v109, %v109
    %v206 = vmul.f32 %v110, %v110
    %v207 = vmul.f32 %v111, %v111
    %v208 = vmul.f32 %v112, %v112
    %v209 = vmul.f32 %v113, %v113
    %v210 = vmul.f32 %v114, %v114
    %v211 = vmul.f32 %v115, %v115
    %v212 = vmul.f32 %v116, %v116
    %v213 = vmul.f32 %v117, %v117
    %v214 = vmul.f32 %v118, %v118
    %v215 = vmul.f32 %v119, %v119
    %v216 = vmul.f32 %v120, %v120
    %v217 = vmul.f32 %v121, %v121
    %v218 = vmul.f32 %v122, %v122
    %v219 = vmul.f32 %v123, %v123
    %v220 = vmul.f32 %v124, %v124
    %v221 = vmul.f32 %v125, %v125
    %v222 = vmul.f32 %v126, %v126
    %v223 = vmul.f32 %v127, %v127
    %v224 = vmul.f32 %v128, %v128
    %v225 = vmul.f32 %v129, %v129
    %v226 = vmul.f32 %v130, %v130
    %v227 = vmul.f32 %v131, %v131
    %v228 = vmul.f32 %v132, %v132
    %v229 = vmul.f32 %v133, %v133
    %v230 = vmul.f32 %v134, %v134
    %v231 = vmul.f32 %v135, %v135
    %v232 = vmul.f32 %v136, %v136
    %v233 = vmul.f32 %v137, %v137
    %v234 = vmul.f32 %v138, %v138
    %v235 = vmul.f32 %v139, %v139
    %v236 = vmul.f32 %v140, %v140
    %v237 = vmul.f32 %v141, %v141
    %v238 = vmul.f32 %v142, %v142
    %v239 = vmul.f32 %v143, %v143
    %v240 = vadd.f32 %v144, %v145
    %v241 = vadd.f32 %v240, %v146
    %v242 = vadd.f32 %v241, %v147
    %v243 = vadd.f32 %v242, %v148
    %v244 = vadd.f32 %v243, %v149
    %245 = vadd.xlane.f32.xlu0 %v244
    %v246 = vpop.xlane.xlu0 %245
    %v247 = vadd.f32 %v150, %v151
    %v248 = vadd.f32 %v247, %v152
    %v249 = vadd.f32 %v248, %v153
    %v250 = vadd.f32 %v249, %v154
    %v251 = vadd.f32 %v250, %v155
    %252 = vadd.xlane.f32.xlu0 %v251
    %v253 = vpop.xlane.xlu0 %252
    %v254 = vadd.f32 %v156, %v157
    %v255 = vadd.f32 %v254, %v158
    %v256 = vadd.f32 %v255, %v159
    %v257 = vadd.f32 %v256, %v160
    %v258 = vadd.f32 %v257, %v161
    %259 = vadd.xlane.f32.xlu0 %v258
    %v260 = vpop.xlane.xlu0 %259
    %v261 = vadd.f32 %v162, %v163
    %v262 = vadd.f32 %v261, %v164
    %v263 = vadd.f32 %v262, %v165
    %v264 = vadd.f32 %v263, %v166
    %v265 = vadd.f32 %v264, %v167
    %266 = vadd.xlane.f32.xlu0 %v265
    %v267 = vpop.xlane.xlu0 %266
    %v268 = vadd.f32 %v168, %v169
    %v269 = vadd.f32 %v268, %v170
    %v270 = vadd.f32 %v269, %v171
    %v271 = vadd.f32 %v270, %v172
    %v272 = vadd.f32 %v271, %v173
    %273 = vadd.xlane.f32.xlu0 %v272
    %v274 = vpop.xlane.xlu0 %273
    %v275 = vadd.f32 %v174, %v175
    %v276 = vadd.f32 %v275, %v176
    %v277 = vadd.f32 %v276, %v177
    %v278 = vadd.f32 %v277, %v178
    %v279 = vadd.f32 %v278, %v179
    %280 = vadd.xlane.f32.xlu0 %v279
    %v281 = vpop.xlane.xlu0 %280
    %v282 = vadd.f32 %v180, %v181
    %v283 = vadd.f32 %v282, %v182
    %v284 = vadd.f32 %v283, %v183
    %v285 = vadd.f32 %v284, %v184
    %v286 = vadd.f32 %v285, %v185
    %287 = vadd.xlane.f32.xlu0 %v286
    %v288 = vpop.xlane.xlu0 %287
    %v289 = vadd.f32 %v186, %v187
    %v290 = vadd.f32 %v289, %v188
    %v291 = vadd.f32 %v290, %v189
    %v292 = vadd.f32 %v291, %v190
    %v293 = vadd.f32 %v292, %v191
    %294 = vadd.xlane.f32.xlu0 %v293
    %v295 = vpop.xlane.xlu0 %294
    %v296 = vadd.f32 %v192, %v193
    %v297 = vadd.f32 %v296, %v194
    %v298 = vadd.f32 %v297, %v195
    %v299 = vadd.f32 %v298, %v196
    %v300 = vadd.f32 %v299, %v197
    %301 = vadd.xlane.f32.xlu0 %v300
    %v302 = vpop.xlane.xlu0 %301
    %v303 = vadd.f32 %v198, %v199
    %v304 = vadd.f32 %v303, %v200
    %v305 = vadd.f32 %v304, %v201
    %v306 = vadd.f32 %v305, %v202
    %v307 = vadd.f32 %v306, %v203
    %308 = vadd.xlane.f32.xlu0 %v307
    %v309 = vpop.xlane.xlu0 %308
    %v310 = vadd.f32 %v204, %v205
    %v311 = vadd.f32 %v310, %v206
    %v312 = vadd.f32 %v311, %v207
    %v313 = vadd.f32 %v312, %v208
    %v314 = vadd.f32 %v313, %v209
    %315 = vadd.xlane.f32.xlu0 %v314
    %v316 = vpop.xlane.xlu0 %315
    %v317 = vadd.f32 %v210, %v211
    %v318 = vadd.f32 %v317, %v212
    %v319 = vadd.f32 %v318, %v213
    %v320 = vadd.f32 %v319, %v214
    %v321 = vadd.f32 %v320, %v215
    %322 = vadd.xlane.f32.xlu0 %v321
    %v323 = vpop.xlane.xlu0 %322
    %v324 = vadd.f32 %v216, %v217
    %v325 = vadd.f32 %v324, %v218
    %v326 = vadd.f32 %v325, %v219
    %v327 = vadd.f32 %v326, %v220
    %v328 = vadd.f32 %v327, %v221
    %329 = vadd.xlane.f32.xlu0 %v328
    %v330 = vpop.xlane.xlu0 %329
    %v331 = vadd.f32 %v222, %v223
    %v332 = vadd.f32 %v331, %v224
    %v333 = vadd.f32 %v332, %v225
    %v334 = vadd.f32 %v333, %v226
    %v335 = vadd.f32 %v334, %v227
    %336 = vadd.xlane.f32.xlu0 %v335
    %v337 = vpop.xlane.xlu0 %336
    %v338 = vadd.f32 %v228, %v229
    %v339 = vadd.f32 %v338, %v230
    %v340 = vadd.f32 %v339, %v231
    %v341 = vadd.f32 %v340, %v232
    %v342 = vadd.f32 %v341, %v233
    %343 = vadd.xlane.f32.xlu0 %v342
    %v344 = vpop.xlane.xlu0 %343
    %v345 = vadd.f32 %v234, %v235
    %v346 = vadd.f32 %v345, %v236
    %v347 = vadd.f32 %v346, %v237
    %v348 = vadd.f32 %v347, %v238
    %v349 = vadd.f32 %v348, %v239
    %350 = vadd.xlane.f32.xlu0 %v349
    %v351 = vpop.xlane.xlu0 %350
    %v352 = vmax.f32 %v246, 1e-16
    %v353 = vmax.f32 %v253, 1e-16
    %v354 = vmax.f32 %v260, 1e-16
    %v355 = vmax.f32 %v267, 1e-16
    %v356 = vmax.f32 %v274, 1e-16
    %v357 = vmax.f32 %v281, 1e-16
    %v358 = vmax.f32 %v288, 1e-16
    %v359 = vmax.f32 %v295, 1e-16
    %v360 = vmax.f32 %v302, 1e-16
    %v361 = vmax.f32 %v309, 1e-16
    %v362 = vmax.f32 %v316, 1e-16
    %v363 = vmax.f32 %v323, 1e-16
    %v364 = vmax.f32 %v330, 1e-16
    %v365 = vmax.f32 %v337, 1e-16
    %v366 = vmax.f32 %v344, 1e-16
    %v367 = vmax.f32 %v351, 1e-16
    %v368 = vrsqrt.pop %v352
    %v369 = vmul.f32 %v368, %v352
    %v370 = vmul.f32 %v369, %v368
    %v371 = vmul.f32 0.5, %v370
    %v372 = vsub.f32 1.5, %v371
    %v373 = vmul.f32 %v368, %v372
    %vm374 = vweird.f32 %v352
    %vm375 = vweird.f32 %v368
    %vm376 = vmor %vm374, %vm375
    %v377 = vsel %vm376, %v368, %v373
    %v378 = vrsqrt.pop %v353
    %v379 = vmul.f32 %v378, %v353
    %v380 = vmul.f32 %v379, %v378
    %v381 = vmul.f32 0.5, %v380
    %v382 = vsub.f32 1.5, %v381
    %v383 = vmul.f32 %v378, %v382
    %vm384 = vweird.f32 %v353
    %vm385 = vweird.f32 %v378
    %vm386 = vmor %vm384, %vm385
    %v387 = vsel %vm386, %v378, %v383
    %v388 = vrsqrt.pop %v354
    %v389 = vmul.f32 %v388, %v354
    %v390 = vmul.f32 %v389, %v388
    %v391 = vmul.f32 0.5, %v390
    %v392 = vsub.f32 1.5, %v391
    %v393 = vmul.f32 %v388, %v392
    %vm394 = vweird.f32 %v354
    %vm395 = vweird.f32 %v388
    %vm396 = vmor %vm394, %vm395
    %v397 = vsel %vm396, %v388, %v393
    %v398 = vrsqrt.pop %v355
    %v399 = vmul.f32 %v398, %v355
    %v400 = vmul.f32 %v399, %v398
    %v401 = vmul.f32 0.5, %v400
    %v402 = vsub.f32 1.5, %v401
    %v403 = vmul.f32 %v398, %v402
    %vm404 = vweird.f32 %v355
    %vm405 = vweird.f32 %v398
    %vm406 = vmor %vm404, %vm405
    %v407 = vsel %vm406, %v398, %v403
    %v408 = vrsqrt.pop %v356
    %v409 = vmul.f32 %v408, %v356
    %v410 = vmul.f32 %v409, %v408
    %v411 = vmul.f32 0.5, %v410
    %v412 = vsub.f32 1.5, %v411
    %v413 = vmul.f32 %v408, %v412
    %vm414 = vweird.f32 %v356
    %vm415 = vweird.f32 %v408
    %vm416 = vmor %vm414, %vm415
    %v417 = vsel %vm416, %v408, %v413
    %v418 = vrsqrt.pop %v357
    %v419 = vmul.f32 %v418, %v357
    %v420 = vmul.f32 %v419, %v418
    %v421 = vmul.f32 0.5, %v420
    %v422 = vsub.f32 1.5, %v421
    %v423 = vmul.f32 %v418, %v422
    %vm424 = vweird.f32 %v357
    %vm425 = vweird.f32 %v418
    %vm426 = vmor %vm424, %vm425
    %v427 = vsel %vm426, %v418, %v423
    %v428 = vrsqrt.pop %v358
    %v429 = vmul.f32 %v428, %v358
    %v430 = vmul.f32 %v429, %v428
    %v431 = vmul.f32 0.5, %v430
    %v432 = vsub.f32 1.5, %v431
    %v433 = vmul.f32 %v428, %v432
    %vm434 = vweird.f32 %v358
    %vm435 = vweird.f32 %v428
    %vm436 = vmor %vm434, %vm435
    %v437 = vsel %vm436, %v428, %v433
    %v438 = vrsqrt.pop %v359
    %v439 = vmul.f32 %v438, %v359
    %v440 = vmul.f32 %v439, %v438
    %v441 = vmul.f32 0.5, %v440
    %v442 = vsub.f32 1.5, %v441
    %v443 = vmul.f32 %v438, %v442
    %vm444 = vweird.f32 %v359
    %vm445 = vweird.f32 %v438
    %vm446 = vmor %vm444, %vm445
    %v447 = vsel %vm446, %v438, %v443
    %v448 = vrsqrt.pop %v360
    %v449 = vmul.f32 %v448, %v360
    %v450 = vmul.f32 %v449, %v448
    %v451 = vmul.f32 0.5, %v450
    %v452 = vsub.f32 1.5, %v451
    %v453 = vmul.f32 %v448, %v452
    %vm454 = vweird.f32 %v360
    %vm455 = vweird.f32 %v448
    %vm456 = vmor %vm454, %vm455
    %v457 = vsel %vm456, %v448, %v453
    %v458 = vrsqrt.pop %v361
    %v459 = vmul.f32 %v458, %v361
    %v460 = vmul.f32 %v459, %v458
    %v461 = vmul.f32 0.5, %v460
    %v462 = vsub.f32 1.5, %v461
    %v463 = vmul.f32 %v458, %v462
    %vm464 = vweird.f32 %v361
    %vm465 = vweird.f32 %v458
    %vm466 = vmor %vm464, %vm465
    %v467 = vsel %vm466, %v458, %v463
    %v468 = vrsqrt.pop %v362
    %v469 = vmul.f32 %v468, %v362
    %v470 = vmul.f32 %v469, %v468
    %v471 = vmul.f32 0.5, %v470
    %v472 = vsub.f32 1.5, %v471
    %v473 = vmul.f32 %v468, %v472
    %vm474 = vweird.f32 %v362
    %vm475 = vweird.f32 %v468
    %vm476 = vmor %vm474, %vm475
    %v477 = vsel %vm476, %v468, %v473
    %v478 = vrsqrt.pop %v363
    %v479 = vmul.f32 %v478, %v363
    %v480 = vmul.f32 %v479, %v478
    %v481 = vmul.f32 0.5, %v480
    %v482 = vsub.f32 1.5, %v481
    %v483 = vmul.f32 %v478, %v482
    %vm484 = vweird.f32 %v363
    %vm485 = vweird.f32 %v478
    %vm486 = vmor %vm484, %vm485
    %v487 = vsel %vm486, %v478, %v483
    %v488 = vrsqrt.pop %v364
    %v489 = vmul.f32 %v488, %v364
    %v490 = vmul.f32 %v489, %v488
    %v491 = vmul.f32 0.5, %v490
    %v492 = vsub.f32 1.5, %v491
    %v493 = vmul.f32 %v488, %v492
    %vm494 = vweird.f32 %v364
    %vm495 = vweird.f32 %v488
    %vm496 = vmor %vm494, %vm495
    %v497 = vsel %vm496, %v488, %v493
    %v498 = vrsqrt.pop %v365
    %v499 = vmul.f32 %v498, %v365
    %v500 = vmul.f32 %v499, %v498
    %v501 = vmul.f32 0.5, %v500
    %v502 = vsub.f32 1.5, %v501
    %v503 = vmul.f32 %v498, %v502
    %vm504 = vweird.f32 %v365
    %vm505 = vweird.f32 %v498
    %vm506 = vmor %vm504, %vm505
    %v507 = vsel %vm506, %v498, %v503
    %v508 = vrsqrt.pop %v366
    %v509 = vmul.f32 %v508, %v366
    %v510 = vmul.f32 %v509, %v508
    %v511 = vmul.f32 0.5, %v510
    %v512 = vsub.f32 1.5, %v511
    %v513 = vmul.f32 %v508, %v512
    %vm514 = vweird.f32 %v366
    %vm515 = vweird.f32 %v508
    %vm516 = vmor %vm514, %vm515
    %v517 = vsel %vm516, %v508, %v513
    %v518 = vrsqrt.pop %v367
    %v519 = vmul.f32 %v518, %v367
    %v520 = vmul.f32 %v519, %v518
    %v521 = vmul.f32 0.5, %v520
    %v522 = vsub.f32 1.5, %v521
    %v523 = vmul.f32 %v518, %v522
    %vm524 = vweird.f32 %v367
    %vm525 = vweird.f32 %v518
    %vm526 = vmor %vm524, %vm525
    %v527 = vsel %vm526, %v518, %v523
    %v528 = vmul.f32 %v48, %v377
    %v529 = vmul.f32 %v49, %v377
    %v530 = vmul.f32 %v50, %v377
    %v531 = vmul.f32 %v51, %v377
    %v532 = vmul.f32 %v52, %v377
    %v533 = vmul.f32 %v53, %v377
    %v534 = vmul.f32 %v54, %v387
    %v535 = vmul.f32 %v55, %v387
    %v536 = vmul.f32 %v56, %v387
    %v537 = vmul.f32 %v57, %v387
    %v538 = vmul.f32 %v58, %v387
    %v539 = vmul.f32 %v59, %v387
    %v540 = vmul.f32 %v60, %v397
    %v541 = vmul.f32 %v61, %v397
    %v542 = vmul.f32 %v62, %v397
    %v543 = vmul.f32 %v63, %v397
    %v544 = vmul.f32 %v64, %v397
    %v545 = vmul.f32 %v65, %v397
    %v546 = vmul.f32 %v66, %v407
    %v547 = vmul.f32 %v67, %v407
    %v548 = vmul.f32 %v68, %v407
    %v549 = vmul.f32 %v69, %v407
    %v550 = vmul.f32 %v70, %v407
    %v551 = vmul.f32 %v71, %v407
    %v552 = vmul.f32 %v72, %v417
    %v553 = vmul.f32 %v73, %v417
    %v554 = vmul.f32 %v74, %v417
    %v555 = vmul.f32 %v75, %v417
    %v556 = vmul.f32 %v76, %v417
    %v557 = vmul.f32 %v77, %v417
    %v558 = vmul.f32 %v78, %v427
    %v559 = vmul.f32 %v79, %v427
    %v560 = vmul.f32 %v80, %v427
    %v561 = vmul.f32 %v81, %v427
    %v562 = vmul.f32 %v82, %v427
    %v563 = vmul.f32 %v83, %v427
    %v564 = vmul.f32 %v84, %v437
    %v565 = vmul.f32 %v85, %v437
    %v566 = vmul.f32 %v86, %v437
    %v567 = vmul.f32 %v87, %v437
    %v568 = vmul.f32 %v88, %v437
    %v569 = vmul.f32 %v89, %v437
    %v570 = vmul.f32 %v90, %v447
    %v571 = vmul.f32 %v91, %v447
    %v572 = vmul.f32 %v92, %v447
    %v573 = vmul.f32 %v93, %v447
    %v574 = vmul.f32 %v94, %v447
    %v575 = vmul.f32 %v95, %v447
    %v576 = vmul.f32 %v96, %v457
    %v577 = vmul.f32 %v97, %v457
    %v578 = vmul.f32 %v98, %v457
    %v579 = vmul.f32 %v99, %v457
    %v580 = vmul.f32 %v100, %v457
    %v581 = vmul.f32 %v101, %v457
    %v582 = vmul.f32 %v102, %v467
    %v583 = vmul.f32 %v103, %v467
    %v584 = vmul.f32 %v104, %v467
    %v585 = vmul.f32 %v105, %v467
    %v586 = vmul.f32 %v106, %v467
    %v587 = vmul.f32 %v107, %v467
    %v588 = vmul.f32 %v108, %v477
    %v589 = vmul.f32 %v109, %v477
    %v590 = vmul.f32 %v110, %v477
    %v591 = vmul.f32 %v111, %v477
    %v592 = vmul.f32 %v112, %v477
    %v593 = vmul.f32 %v113, %v477
    %v594 = vmul.f32 %v114, %v487
    %v595 = vmul.f32 %v115, %v487
    %v596 = vmul.f32 %v116, %v487
    %v597 = vmul.f32 %v117, %v487
    %v598 = vmul.f32 %v118, %v487
    %v599 = vmul.f32 %v119, %v487
    %v600 = vmul.f32 %v120, %v497
    %v601 = vmul.f32 %v121, %v497
    %v602 = vmul.f32 %v122, %v497
    %v603 = vmul.f32 %v123, %v497
    %v604 = vmul.f32 %v124, %v497
    %v605 = vmul.f32 %v125, %v497
    %v606 = vmul.f32 %v126, %v507
    %v607 = vmul.f32 %v127, %v507
    %v608 = vmul.f32 %v128, %v507
    %v609 = vmul.f32 %v129, %v507
    %v610 = vmul.f32 %v130, %v507
    %v611 = vmul.f32 %v131, %v507
    %v612 = vmul.f32 %v132, %v517
    %v613 = vmul.f32 %v133, %v517
    %v614 = vmul.f32 %v134, %v517
    %v615 = vmul.f32 %v135, %v517
    %v616 = vmul.f32 %v136, %v517
    %v617 = vmul.f32 %v137, %v517
    %v618 = vmul.f32 %v138, %v527
    %v619 = vmul.f32 %v139, %v527
    %v620 = vmul.f32 %v140, %v527
    %v621 = vmul.f32 %v141, %v527
    %v622 = vmul.f32 %v142, %v527
    %v623 = vmul.f32 %v143, %v527
    %v624 = vmul.f32 %v42, %v42
    %v625 = vmul.f32 %v43, %v43
    %v626 = vmul.f32 %v44, %v44
    %v627 = vmul.f32 %v45, %v45
    %v628 = vmul.f32 %v46, %v46
    %v629 = vmul.f32 %v47, %v47
    %v630 = vadd.f32 %v624, %v625
    %v631 = vadd.f32 %v630, %v626
    %v632 = vadd.f32 %v631, %v627
    %v633 = vadd.f32 %v632, %v628
    %v634 = vadd.f32 %v633, %v629
    %635 = vadd.xlane.f32.xlu0 %v634
    %v636 = vpop.xlane.xlu0 %635
    %v637 = vmax.f32 %v636, 1e-16
    %v638 = vrsqrt.pop %v637
    %v639 = vmul.f32 %v638, %v637
    %v640 = vmul.f32 %v639, %v638
    %v641 = vmul.f32 0.5, %v640
    %v642 = vsub.f32 1.5, %v641
    %v643 = vmul.f32 %v638, %v642
    %vm644 = vweird.f32 %v637
    %vm645 = vweird.f32 %v638
    %vm646 = vmor %vm644, %vm645
    %v647 = vsel %vm646, %v638, %v643
    %648 = vmatpush.xpose.msra.mxu0 %v618
    %649 = vmatpush.xpose.msra.mxu0 %v612
    %650 = vmatpush.xpose.msra.mxu0 %v606
    %651 = vmatpush.xpose.msra.mxu0 %v600
    %652 = vmatpush.xpose.msra.mxu0 %v594
    %653 = vmatpush.xpose.msra.mxu0 %v588
    %654 = vmatpush.xpose.msra.mxu0 %v582
    %655 = vmatpush.xpose.msra.mxu0 %v576
    %656 = vmatpush.xpose.msra.mxu0 %v570
    %657 = vmatpush.xpose.msra.mxu0 %v564
    %658 = vmatpush.xpose.msra.mxu0 %v558
    %659 = vmatpush.xpose.msra.mxu0 %v552
    %660 = vmatpush.xpose.msra.mxu0 %v546
    %661 = vmatpush.xpose.msra.mxu0 %v540
    %662 = vmatpush.xpose.msra.mxu0 %v534
    %663 = vmatpush.xpose.msra.mxu0 %v528
    %664 = vmatmul.f32.gmra.mxu0 %v42
    %v665 = vpop.f32.mrf.mxu0
    %v666 = vadd.f32 0.0, %v665
    %667 = vdwg.mxu0
    %668 = vmatpush.xpose.msra.mxu0 %v619
    %669 = vmatpush.xpose.msra.mxu0 %v613
    %670 = vmatpush.xpose.msra.mxu0 %v607
    %671 = vmatpush.xpose.msra.mxu0 %v601
    %672 = vmatpush.xpose.msra.mxu0 %v595
    %673 = vmatpush.xpose.msra.mxu0 %v589
    %674 = vmatpush.xpose.msra.mxu0 %v583
    %675 = vmatpush.xpose.msra.mxu0 %v577
    %676 = vmatpush.xpose.msra.mxu0 %v571
    %677 = vmatpush.xpose.msra.mxu0 %v565
    %678 = vmatpush.xpose.msra.mxu0 %v559
    %679 = vmatpush.xpose.msra.mxu0 %v553
    %680 = vmatpush.xpose.msra.mxu0 %v547
    %681 = vmatpush.xpose.msra.mxu0 %v541
    %682 = vmatpush.xpose.msra.mxu0 %v535
    %683 = vmatpush.xpose.msra.mxu0 %v529
    %684 = vmatmul.f32.gmra.mxu0 %v43
    %v685 = vpop.f32.mrf.mxu0
    %v686 = vadd.f32 %v666, %v685
    %687 = vdwg.mxu0
    %688 = vmatpush.xpose.msra.mxu0 %v620
    %689 = vmatpush.xpose.msra.mxu0 %v614
    %690 = vmatpush.xpose.msra.mxu0 %v608
    %691 = vmatpush.xpose.msra.mxu0 %v602
    %692 = vmatpush.xpose.msra.mxu0 %v596
    %693 = vmatpush.xpose.msra.mxu0 %v590
    %694 = vmatpush.xpose.msra.mxu0 %v584
    %695 = vmatpush.xpose.msra.mxu0 %v578
    %696 = vmatpush.xpose.msra.mxu0 %v572
    %697 = vmatpush.xpose.msra.mxu0 %v566
    %698 = vmatpush.xpose.msra.mxu0 %v560
    %699 = vmatpush.xpose.msra.mxu0 %v554
    %700 = vmatpush.xpose.msra.mxu0 %v548
    %701 = vmatpush.xpose.msra.mxu0 %v542
    %702 = vmatpush.xpose.msra.mxu0 %v536
    %703 = vmatpush.xpose.msra.mxu0 %v530
    %704 = vmatmul.f32.gmra.mxu0 %v44
    %v705 = vpop.f32.mrf.mxu0
    %v706 = vadd.f32 %v686, %v705
    %707 = vdwg.mxu0
    %708 = vmatpush.xpose.msra.mxu0 %v621
    %709 = vmatpush.xpose.msra.mxu0 %v615
    %710 = vmatpush.xpose.msra.mxu0 %v609
    %711 = vmatpush.xpose.msra.mxu0 %v603
    %712 = vmatpush.xpose.msra.mxu0 %v597
    %713 = vmatpush.xpose.msra.mxu0 %v591
    %714 = vmatpush.xpose.msra.mxu0 %v585
    %715 = vmatpush.xpose.msra.mxu0 %v579
    %716 = vmatpush.xpose.msra.mxu0 %v573
    %717 = vmatpush.xpose.msra.mxu0 %v567
    %718 = vmatpush.xpose.msra.mxu0 %v561
    %719 = vmatpush.xpose.msra.mxu0 %v555
    %720 = vmatpush.xpose.msra.mxu0 %v549
    %721 = vmatpush.xpose.msra.mxu0 %v543
    %722 = vmatpush.xpose.msra.mxu0 %v537
    %723 = vmatpush.xpose.msra.mxu0 %v531
    %724 = vmatmul.f32.gmra.mxu0 %v45
    %v725 = vpop.f32.mrf.mxu0
    %v726 = vadd.f32 %v706, %v725
    %727 = vdwg.mxu0
    %728 = vmatpush.xpose.msra.mxu0 %v622
    %729 = vmatpush.xpose.msra.mxu0 %v616
    %730 = vmatpush.xpose.msra.mxu0 %v610
    %731 = vmatpush.xpose.msra.mxu0 %v604
    %732 = vmatpush.xpose.msra.mxu0 %v598
    %733 = vmatpush.xpose.msra.mxu0 %v592
    %734 = vmatpush.xpose.msra.mxu0 %v586
    %735 = vmatpush.xpose.msra.mxu0 %v580
    %736 = vmatpush.xpose.msra.mxu0 %v574
    %737 = vmatpush.xpose.msra.mxu0 %v568
    %738 = vmatpush.xpose.msra.mxu0 %v562
    %739 = vmatpush.xpose.msra.mxu0 %v556
    %740 = vmatpush.xpose.msra.mxu0 %v550
    %741 = vmatpush.xpose.msra.mxu0 %v544
    %742 = vmatpush.xpose.msra.mxu0 %v538
    %743 = vmatpush.xpose.msra.mxu0 %v532
    %744 = vmatmul.f32.gmra.mxu0 %v46
    %v745 = vpop.f32.mrf.mxu0
    %v746 = vadd.f32 %v726, %v745
    %747 = vdwg.mxu0
    %748 = vmatpush.xpose.msra.mxu0 %v623
    %749 = vmatpush.xpose.msra.mxu0 %v617
    %750 = vmatpush.xpose.msra.mxu0 %v611
    %751 = vmatpush.xpose.msra.mxu0 %v605
    %752 = vmatpush.xpose.msra.mxu0 %v599
    %753 = vmatpush.xpose.msra.mxu0 %v593
    %754 = vmatpush.xpose.msra.mxu0 %v587
    %755 = vmatpush.xpose.msra.mxu0 %v581
    %756 = vmatpush.xpose.msra.mxu0 %v575
    %757 = vmatpush.xpose.msra.mxu0 %v569
    %758 = vmatpush.xpose.msra.mxu0 %v563
    %759 = vmatpush.xpose.msra.mxu0 %v557
    %760 = vmatpush.xpose.msra.mxu0 %v551
    %761 = vmatpush.xpose.msra.mxu0 %v545
    %762 = vmatpush.xpose.msra.mxu0 %v539
    %763 = vmatpush.xpose.msra.mxu0 %v533
    %764 = vmatmul.f32.gmra.mxu0 %v47
    %v765 = vpop.f32.mrf.mxu0
    %v766 = vadd.f32 %v746, %v765
    %767 = vdwg.mxu0
    %v768 = vmul.f32 %v766, %v647
    %769 = vst [vmem:[#allocation7] sm:$0xff] %v768
    // Predicated region
    $region18: #{tpu_custom_call.1} parent=1 // pred_check
      _
    $region19: #{tpu_custom_call.1} parent=1 // pred_check_branch
      %771 = sbr.rel (0) target = $region21
    $region20: #{tpu_custom_call.1} parent=1 // pred_region
      %773 = vsyncadd [#allocation4], 0
      %s775 = sshll.u32 [#allocation7], 4
      %s776 = int_to_ptr.vmem [resolvable:$true] %s775
      %s777 = sshll.u32 %s2, 4
      %s778 = int_to_ptr.hbm [resolvable:$true] %s777
      %780 = dma.vmem_to_hbm [thread:$0]  %s776, 128, %s778, [#allocation4]
    $region21: #{tpu_custom_call.1} parent=1 // pred_fallthru
      _
    // Predicated region
    $region22: #{tpu_custom_call.1} parent=1 // pred_check
      _
    $region23: #{tpu_custom_call.1} parent=1 // pred_check_branch
      %782 = sbr.rel (0) target = $region25
    $region24: #{tpu_custom_call.1} parent=1 // pred_region
      %784 = dma.done [#allocation4], 128
    $region25: #{tpu_custom_call.1} parent=1 // pred_fallthru
      _
    %785 = vsyncpa [#allocation3], 1
    %786 = vsyncpa [#allocation6], 1
    %787 = vsyncpa [#allocation4], 1

</llo_original>
